<compile_context>
chip_gen: v7x
topology: tpu7x:2x2x1
jax: 0.10.0
libtpu: 0.0.40
codegen_flags: <defaults>
</compile_context>

<pallas_src>
import functools
import math

import jax
import jax.numpy as jnp
import numpy as np
from jax.experimental import pallas as pl
from jax.experimental.pallas import tpu as pltpu


# ----------------------------------------------------------------------------
# Kernel
# ----------------------------------------------------------------------------
def _double_conv_kernel(h, x_ref, t1_ref, b1_ref, t2_ref, b2_ref, o_ref):
    """Fused (Conv3x3 -> BN -> ReLU) x 2 for a block of Nb batch samples.

    h      : static image height (rows per sample inside the block)
    x_ref  : (M, W*Cin)          bf16, M = Nb*H (Nb samples stacked row-wise)
    t1_ref : (3, W*Cin,  W*Cmid) bf16 block-Toeplitz weights (BN scale folded)
    b1_ref : (1, W*Cmid)         f32 folded conv-bias + BN bias
    t2_ref : (3, W*Cmid, W*Cout) bf16
    b2_ref : (1, W*Cout)         f32
    o_ref  : (M, W*Cout)         bf16 lane-dense output block
    """
    m = x_ref.shape[0]
    # Per-sample row index (samples are stacked in contiguous blocks of h rows).
    row = jax.lax.broadcasted_iota(jnp.int32, (m, 1), 0)
    hh = row % h
    top = hh == 0          # first row of a sample: nothing above it
    bot = hh == h - 1      # last row of a sample: nothing below it

    def conv_bias_relu(x_bf, t_ref, b_ref):
        # 3x3 'same' conv: the W-direction taps + zero padding are folded into
        # the block-Toeplitz weights; the 3 H-direction taps are 3 full-width
        # MXU matmuls whose f32 partial sums are shifted by +/-1 row with
        # pltpu.roll (XLU) and edge-masked (VPU) before accumulation.
        p0 = jnp.dot(x_bf, t_ref[0], preferred_element_type=jnp.float32)
        p1 = jnp.dot(x_bf, t_ref[1], preferred_element_type=jnp.float32)
        p2 = jnp.dot(x_bf, t_ref[2], preferred_element_type=jnp.float32)
        # out[g] = p0[g-1] + p1[g] + p2[g+1]   (zero past each sample's edges)
        up = jnp.where(top, 0.0, pltpu.roll(p0, shift=1, axis=0))
        dn = jnp.where(bot, 0.0, pltpu.roll(p2, shift=m - 1, axis=0))
        y = up + p1 + dn + b_ref[...]          # bias-add (BN scale in weights)
        return jnp.maximum(y, 0.0)             # ReLU, (M, W*Cout) f32

    y1 = conv_bias_relu(x_ref[...], t1_ref, b1_ref)              # (M, W*Cmid)
    # Intermediate activation never leaves VMEM/vregs; single bf16 cast.
    y2 = conv_bias_relu(y1.astype(jnp.bfloat16), t2_ref, b2_ref)
    o_ref[...] = y2.astype(o_ref.dtype)        # bf16 store (half HBM writeback)


def _double_conv_pallas(x_packed, t1, b1, t2, b2, *, h, nb):
    """x_packed: (N*H, W*Cin) bf16 -> (N*H, W*Cout) bf16."""
    n_rows, k1 = x_packed.shape
    w_cout = t2.shape[-1]
    m = nb * h                                 # MXU M dimension per grid step
    assert n_rows % m == 0 and m % 8 == 0, (n_rows, m)
    grid = (n_rows // m,)
    # TODO(synk): at large W*C the Toeplitz weights should be W-tiled along the
    # output-column axis (extra grid dim) and/or given pipeline_mode=
    # pl.Buffered(1) so they fit v7x's 64 MiB VMEM without double buffering.
    return pl.pallas_call(
        functools.partial(_double_conv_kernel, h),
        out_shape=jax.ShapeDtypeStruct((n_rows, w_cout), jnp.bfloat16),
        grid_spec=pltpu.PrefetchScalarGridSpec(
            num_scalar_prefetch=0,
            grid=grid,                         # one step per Nb-sample block
            in_specs=[
                pl.BlockSpec((m, k1), lambda i: (i, 0)),
                pl.BlockSpec(t1.shape, lambda i: (0, 0, 0)),
                pl.BlockSpec(b1.shape, lambda i: (0, 0)),
                pl.BlockSpec(t2.shape, lambda i: (0, 0, 0)),
                pl.BlockSpec(b2.shape, lambda i: (0, 0)),
            ],
            out_specs=pl.BlockSpec((m, w_cout), lambda i: (i, 0)),
        ),
        compiler_params=pltpu.CompilerParams(
            dimension_semantics=("parallel",),  # batch-block axis
            vmem_limit_bytes=32 * 1024 * 1024,
        ),
    )(x_packed, t1, b1, t2, b2)


# ----------------------------------------------------------------------------
# Host-side weight prepacking / parameter init
# ----------------------------------------------------------------------------
def _lane_pad_channels(c, width, lane=128):
    """Smallest c' >= c such that width*c' is a multiple of `lane`."""
    step = lane // math.gcd(width, lane)
    return ((c + step - 1) // step) * step


def _pick_batch_block(n, h, target_m=256):
    """Largest divisor of n with nb*h <= target_m (always >= 1)."""
    best = 1
    for nb in range(1, n + 1):
        if n % nb == 0 and nb * h <= target_m:
            best = nb
    return best


def _toeplitz_weights(w_hwio, width, col_scale):
    """(3,3,Cin,Cout) -> (3, W*Cin, W*Cout) block-Toeplitz tensor T such that a
    3x3 'same' conv of an (H, W, Cin) image packed as rows of (W*Cin,) equals
        out[h] = sum_dh  X[h+dh-1, :] @ T[dh]      (zero rows past the edges).
    The W-direction taps / zero padding are folded into T; the eval-mode BN
    scale is folded into the output columns."""
    w = np.asarray(w_hwio, np.float32)                 # (3, 3, Cin, Cout)
    _, _, cin, cout = w.shape
    t = np.zeros((3, width, cin, width, cout), np.float32)
    for dh in range(3):
        for wo in range(width):                        # output column
            for dw in range(3):
                j = wo + dw - 1                        # input column
                if 0 <= j < width:
                    t[dh, j, :, wo, :] = w[dh, dw]
    t *= np.asarray(col_scale, np.float32)[None, None, None, None, :]
    return t.reshape(3, width * cin, width * cout)


def init_double_conv_params(key, in_ch, out_ch, width):
    """Deterministic synthetic parameters matching DoubleConv.__init__ shapes,
    prepacked for the lane-dense Pallas kernel (pure host-side preprocessing)."""
    k1, k2, k3, k4 = jax.random.split(key, 4)
    eps = 1e-5
    cin_pad = _lane_pad_channels(in_ch, width)         # lane-dense layer-1 K

    def make_layer(kw, kb, cin, cin_p, cout):
        # Conv2d weight (cout, cin, 3, 3) -> HWIO (3, 3, cin, cout)
        w_oihw = jax.random.normal(kw, (cout, cin, 3, 3), jnp.float32) * 0.1
        conv_b = jax.random.normal(kb, (cout,), jnp.float32) * 0.1
        w_hwio = jnp.transpose(w_oihw, (2, 3, 1, 0))
        # BatchNorm2d at init: gamma=1, beta=0, running_mean=0, running_var=1.
        gamma = jnp.ones((cout,), jnp.float32)
        beta = jnp.zeros((cout,), jnp.float32)
        r_mean = jnp.zeros((cout,), jnp.float32)
        r_var = jnp.ones((cout,), jnp.float32)
        # Fold conv bias + eval-mode BN:  y = scale * conv(x) + bias
        scale = gamma / jnp.sqrt(r_var + eps)
        bias = (conv_b - r_mean) * scale + beta
        # Zero-pad input channels (matches the zero-padded activation lanes).
        w_pad = np.zeros((3, 3, cin_p, cout), np.float32)
        w_pad[:, :, :cin, :] = np.asarray(w_hwio)
        t = _toeplitz_weights(w_pad, width, np.asarray(scale))
        return dict(
            w_hwio=w_hwio, scale=scale, bias=bias,      # f32, for reference
            t=jnp.asarray(t, jnp.bfloat16),             # (3, W*cin_p, W*cout)
            bias_t=jnp.tile(bias, width)[None, :],      # (1, W*cout) f32
        )

    return [make_layer(k1, k2, in_ch, cin_pad, out_ch),
            make_layer(k3, k4, out_ch, out_ch, out_ch)]


# ----------------------------------------------------------------------------
# Public forward (PyTorch-compatible NCHW in / NCHW out)
# ----------------------------------------------------------------------------
@jax.jit
def double_conv(x_nchw, t1, b1, t2, b2):
    N, c_in, H, W = x_nchw.shape
    w_cout = t2.shape[-1]
    c_out = w_cout // W
    cin_p = t1.shape[1] // W
    # TODO(synk): keep activations in the packed (N*H, W*C) bf16 layout across
    # the whole model to avoid these per-module NCHW<->NHWC transposes.
    x = jnp.transpose(x_nchw, (0, 2, 3, 1)).astype(jnp.bfloat16)   # NHWC bf16
    if cin_p != c_in:
        x = jnp.pad(x, ((0, 0), (0, 0), (0, 0), (0, cin_p - c_in)))
    x = x.reshape(N * H, W * cin_p)                    # pack (W, Cin) on lanes
    nb = _pick_batch_block(N, H)                       # samples per grid step
    y = _double_conv_pallas(x, t1, b1, t2, b2, h=H, nb=nb)   # (N*H, W*Cout) bf16
    y = y.reshape(N, H, W, c_out)
    # f32 NCHW to match the PyTorch module's interface dtype.
    return jnp.transpose(y, (0, 3, 1, 2)).astype(jnp.float32)


# ----------------------------------------------------------------------------
# Pure-JAX reference and test
# ----------------------------------------------------------------------------
def _reference(x_nchw, params, bf16_inputs=False):
    """lax-conv reference. With bf16_inputs=True it rounds each layer's input
    and the weights to bf16 (matching the kernel's MXU precision) but keeps
    full-f32 accumulation."""
    x = jnp.transpose(x_nchw, (0, 2, 3, 1))
    for p in params:
        xi, w = x, p["w_hwio"]
        if bf16_inputs:
            xi = xi.astype(jnp.bfloat16).astype(jnp.float32)
            w = w.astype(jnp.bfloat16).astype(jnp.float32)
        y = jax.lax.conv_general_dilated(
            xi, w, window_strides=(1, 1), padding="SAME",
            dimension_numbers=("NHWC", "HWIO", "NHWC"),
            precision=jax.lax.Precision.HIGHEST)
        y = y * p["scale"] + p["bias"]
        x = jnp.maximum(y, 0.0)
    return jnp.transpose(x, (0, 3, 1, 2))


if __name__ == "__main__":
    key = jax.random.PRNGKey(0)
    k_x, k_p = jax.random.split(key)

    N, IN_CH, OUT_CH, H, W = 2, 4, 8, 16, 16
    x = jax.random.normal(k_x, (N, IN_CH, H, W), jnp.float32)   # NCHW like PyTorch
    params = init_double_conv_params(k_p, IN_CH, OUT_CH, W)
    p0, p1 = params

    out = double_conv(x, p0["t"], p0["bias_t"], p1["t"], p1["bias_t"])
    out = jax.block_until_ready(out)
    assert out.shape == (N, OUT_CH, H, W)

    # Tight check: reference fed the same bf16-rounded activations/weights
    # (kernel additionally rounds its final output to bf16).
    ref_bf16 = jax.block_until_ready(_reference(x, params, bf16_inputs=True))
    np.testing.assert_allclose(np.asarray(out), np.asarray(ref_bf16),
                               rtol=2e-2, atol=2e-2)
    # Loose check against pure-f32 semantics (bf16 MXU operands / bf16 kernel
    # output are the only deliberate deviations from the PyTorch f32 forward).
    ref_f32 = jax.block_until_ready(_reference(x, params, bf16_inputs=False))
    np.testing.assert_allclose(np.asarray(out), np.asarray(ref_f32),
                               rtol=5e-2, atol=5e-2)

    print("KERNEL_OK")
</pallas_src>

<mosaic_0001>
module attributes {stable_mosaic.version = 11 : i64} {
  func.func @_double_conv_kernel(%arg0: i32, %arg1: memref<32x128xbf16, #tpu.memory_space<vmem>>, %arg2: memref<3x128x128xbf16, #tpu.memory_space<vmem>>, %arg3: memref<1x128xf32, #tpu.memory_space<vmem>>, %arg4: memref<3x128x128xbf16, #tpu.memory_space<vmem>>, %arg5: memref<1x128xf32, #tpu.memory_space<vmem>>, %arg6: memref<32x128xbf16, #tpu.memory_space<vmem>>) attributes {dimension_semantics = [#tpu.dimension_semantics<parallel>], iteration_bounds = array<i64: 1>, scalar_prefetch = 0 : i64, scratch_operands = 0 : i64, tpu.core_type = #tpu.core_type<tc>, window_params = [{transform_indices = @transform_0, window_bounds = array<i64: 32, 128>}, {pipeline_mode = #tpu.pipeline_mode<synchronous>, transform_indices = @transform_1, window_bounds = array<i64: 3, 128, 128>}, {pipeline_mode = #tpu.pipeline_mode<synchronous>, transform_indices = @transform_2, window_bounds = array<i64: 1, 128>}, {pipeline_mode = #tpu.pipeline_mode<synchronous>, transform_indices = @transform_3, window_bounds = array<i64: 3, 128, 128>}, {pipeline_mode = #tpu.pipeline_mode<synchronous>, transform_indices = @transform_4, window_bounds = array<i64: 1, 128>}, {transform_indices = @transform_5, window_bounds = array<i64: 32, 128>}]} {
    %0 = tpu.iota {dimensions = array<i32: 0>} : vector<32x1xi32>
    %c16_i32 = arith.constant 16 : i32
    %c0_i32 = arith.constant 0 : i32
    %1 = arith.cmpi eq, %c16_i32, %c0_i32 : i32
    %c1_i32 = arith.constant 1 : i32
    %2 = arith.select %1, %c1_i32, %c16_i32 : i32
    %3 = vector.broadcast %2 : i32 to vector<32x1xi32>
    %4 = arith.remsi %0, %3 : vector<32x1xi32>
    %c0_i32_0 = arith.constant 0 : i32
    %5 = vector.broadcast %c0_i32_0 : i32 to vector<32x1xi32>
    %6 = arith.cmpi ne, %4, %5 : vector<32x1xi32>
    %c0_i32_1 = arith.constant 0 : i32
    %7 = vector.broadcast %c0_i32_1 : i32 to vector<32x1xi32>
    %8 = arith.cmpi slt, %4, %7 : vector<32x1xi32>
    %c0_i32_2 = arith.constant 0 : i32
    %9 = arith.cmpi slt, %2, %c0_i32_2 : i32
    %10 = vector.broadcast %9 : i1 to vector<32x1xi1>
    %11 = vector.broadcast %10 : vector<32x1xi1> to vector<32x1xi1>
    %12 = arith.xori %8, %11 : vector<32x1xi1>
    %13 = arith.andi %12, %6 : vector<32x1xi1>
    %14 = vector.broadcast %2 : i32 to vector<32x1xi32>
    %15 = arith.addi %4, %14 : vector<32x1xi32>
    %16 = arith.select %13, %15, %4 : vector<32x1xi1>, vector<32x1xi32>
    %c0_i32_3 = arith.constant 0 : i32
    %17 = vector.broadcast %c0_i32_3 : i32 to vector<32x1xi32>
    %18 = arith.cmpi eq, %16, %17 : vector<32x1xi32>
    %c15_i32 = arith.constant 15 : i32
    %19 = vector.broadcast %c15_i32 : i32 to vector<32x1xi32>
    %20 = arith.cmpi eq, %16, %19 : vector<32x1xi32>
    %c0 = arith.constant 0 : index
    %c0_4 = arith.constant 0 : index
    %21 = vector.load %arg1[%c0, %c0_4] : memref<32x128xbf16, #tpu.memory_space<vmem>>, vector<32x128xbf16>
    %c0_5 = arith.constant 0 : index
    %c0_6 = arith.constant 0 : index
    %c0_7 = arith.constant 0 : index
    %22 = vector.load %arg2[%c0_5, %c0_6, %c0_7] : memref<3x128x128xbf16, #tpu.memory_space<vmem>>, vector<1x128x128xbf16>
    %23 = vector.shape_cast %22 : vector<1x128x128xbf16> to vector<128x128xbf16>
    %cst = arith.constant dense<0.000000e+00> : vector<32x128xf32>
    %24 = tpu.matmul %21, %23, %cst {dimension_numbers = #tpu.dot_dimension_numbers<[1], [0], [0], [1], [0, 0, 1, 1], [], []>} : vector<32x128xbf16>, vector<128x128xbf16>, vector<32x128xf32> -> vector<32x128xf32>
    %c1 = arith.constant 1 : index
    %c0_8 = arith.constant 0 : index
    %c0_9 = arith.constant 0 : index
    %25 = vector.load %arg2[%c1, %c0_8, %c0_9] : memref<3x128x128xbf16, #tpu.memory_space<vmem>>, vector<1x128x128xbf16>
    %26 = vector.shape_cast %25 : vector<1x128x128xbf16> to vector<128x128xbf16>
    %cst_10 = arith.constant dense<0.000000e+00> : vector<32x128xf32>
    %27 = tpu.matmul %21, %26, %cst_10 {dimension_numbers = #tpu.dot_dimension_numbers<[1], [0], [0], [1], [0, 0, 1, 1], [], []>} : vector<32x128xbf16>, vector<128x128xbf16>, vector<32x128xf32> -> vector<32x128xf32>
    %c2 = arith.constant 2 : index
    %c0_11 = arith.constant 0 : index
    %c0_12 = arith.constant 0 : index
    %28 = vector.load %arg2[%c2, %c0_11, %c0_12] : memref<3x128x128xbf16, #tpu.memory_space<vmem>>, vector<1x128x128xbf16>
    %29 = vector.shape_cast %28 : vector<1x128x128xbf16> to vector<128x128xbf16>
    %cst_13 = arith.constant dense<0.000000e+00> : vector<32x128xf32>
    %30 = tpu.matmul %21, %29, %cst_13 {dimension_numbers = #tpu.dot_dimension_numbers<[1], [0], [0], [1], [0, 0, 1, 1], [], []>} : vector<32x128xbf16>, vector<128x128xbf16>, vector<32x128xf32> -> vector<32x128xf32>
    %c1_i32_14 = arith.constant 1 : i32
    %31 = tpu.dynamic_rotate %24 by %c1_i32_14 dim 0 : vector<32x128xf32>, i32 -> vector<32x128xf32>
    %cst_15 = arith.constant 0.000000e+00 : f32
    %32 = vector.shape_cast %18 : vector<32x1xi1> to vector<32x1xi1>
    %33 = vector.broadcast %32 : vector<32x1xi1> to vector<32x128xi1>
    %34 = vector.broadcast %cst_15 : f32 to vector<32x128xf32>
    %35 = arith.select %33, %34, %31 : vector<32x128xi1>, vector<32x128xf32>
    %c31_i32 = arith.constant 31 : i32
    %36 = tpu.dynamic_rotate %30 by %c31_i32 dim 0 : vector<32x128xf32>, i32 -> vector<32x128xf32>
    %cst_16 = arith.constant 0.000000e+00 : f32
    %37 = vector.shape_cast %20 : vector<32x1xi1> to vector<32x1xi1>
    %38 = vector.broadcast %37 : vector<32x1xi1> to vector<32x128xi1>
    %39 = vector.broadcast %cst_16 : f32 to vector<32x128xf32>
    %40 = arith.select %38, %39, %36 : vector<32x128xi1>, vector<32x128xf32>
    %41 = arith.addf %35, %27 : vector<32x128xf32>
    %42 = arith.addf %41, %40 : vector<32x128xf32>
    %c0_17 = arith.constant 0 : index
    %c0_18 = arith.constant 0 : index
    %43 = vector.load %arg3[%c0_17, %c0_18] : memref<1x128xf32, #tpu.memory_space<vmem>>, vector<1x128xf32>
    %44 = vector.broadcast %43 : vector<1x128xf32> to vector<32x128xf32>
    %45 = arith.addf %42, %44 : vector<32x128xf32>
    %cst_19 = arith.constant 0.000000e+00 : f32
    %46 = vector.broadcast %cst_19 : f32 to vector<32x128xf32>
    %47 = arith.maximumf %45, %46 : vector<32x128xf32>
    %48 = arith.truncf %47 : vector<32x128xf32> to vector<32x128xbf16>
    %c0_20 = arith.constant 0 : index
    %c0_21 = arith.constant 0 : index
    %c0_22 = arith.constant 0 : index
    %49 = vector.load %arg4[%c0_20, %c0_21, %c0_22] : memref<3x128x128xbf16, #tpu.memory_space<vmem>>, vector<1x128x128xbf16>
    %50 = vector.shape_cast %49 : vector<1x128x128xbf16> to vector<128x128xbf16>
    %cst_23 = arith.constant dense<0.000000e+00> : vector<32x128xf32>
    %51 = tpu.matmul %48, %50, %cst_23 {dimension_numbers = #tpu.dot_dimension_numbers<[1], [0], [0], [1], [0, 0, 1, 1], [], []>} : vector<32x128xbf16>, vector<128x128xbf16>, vector<32x128xf32> -> vector<32x128xf32>
    %c1_24 = arith.constant 1 : index
    %c0_25 = arith.constant 0 : index
    %c0_26 = arith.constant 0 : index
    %52 = vector.load %arg4[%c1_24, %c0_25, %c0_26] : memref<3x128x128xbf16, #tpu.memory_space<vmem>>, vector<1x128x128xbf16>
    %53 = vector.shape_cast %52 : vector<1x128x128xbf16> to vector<128x128xbf16>
    %cst_27 = arith.constant dense<0.000000e+00> : vector<32x128xf32>
    %54 = tpu.matmul %48, %53, %cst_27 {dimension_numbers = #tpu.dot_dimension_numbers<[1], [0], [0], [1], [0, 0, 1, 1], [], []>} : vector<32x128xbf16>, vector<128x128xbf16>, vector<32x128xf32> -> vector<32x128xf32>
    %c2_28 = arith.constant 2 : index
    %c0_29 = arith.constant 0 : index
    %c0_30 = arith.constant 0 : index
    %55 = vector.load %arg4[%c2_28, %c0_29, %c0_30] : memref<3x128x128xbf16, #tpu.memory_space<vmem>>, vector<1x128x128xbf16>
    %56 = vector.shape_cast %55 : vector<1x128x128xbf16> to vector<128x128xbf16>
    %cst_31 = arith.constant dense<0.000000e+00> : vector<32x128xf32>
    %57 = tpu.matmul %48, %56, %cst_31 {dimension_numbers = #tpu.dot_dimension_numbers<[1], [0], [0], [1], [0, 0, 1, 1], [], []>} : vector<32x128xbf16>, vector<128x128xbf16>, vector<32x128xf32> -> vector<32x128xf32>
    %c1_i32_32 = arith.constant 1 : i32
    %58 = tpu.dynamic_rotate %51 by %c1_i32_32 dim 0 : vector<32x128xf32>, i32 -> vector<32x128xf32>
    %cst_33 = arith.constant 0.000000e+00 : f32
    %59 = vector.shape_cast %18 : vector<32x1xi1> to vector<32x1xi1>
    %60 = vector.broadcast %59 : vector<32x1xi1> to vector<32x128xi1>
    %61 = vector.broadcast %cst_33 : f32 to vector<32x128xf32>
    %62 = arith.select %60, %61, %58 : vector<32x128xi1>, vector<32x128xf32>
    %c31_i32_34 = arith.constant 31 : i32
    %63 = tpu.dynamic_rotate %57 by %c31_i32_34 dim 0 : vector<32x128xf32>, i32 -> vector<32x128xf32>
    %cst_35 = arith.constant 0.000000e+00 : f32
    %64 = vector.shape_cast %20 : vector<32x1xi1> to vector<32x1xi1>
    %65 = vector.broadcast %64 : vector<32x1xi1> to vector<32x128xi1>
    %66 = vector.broadcast %cst_35 : f32 to vector<32x128xf32>
    %67 = arith.select %65, %66, %63 : vector<32x128xi1>, vector<32x128xf32>
    %68 = arith.addf %62, %54 : vector<32x128xf32>
    %69 = arith.addf %68, %67 : vector<32x128xf32>
    %c0_36 = arith.constant 0 : index
    %c0_37 = arith.constant 0 : index
    %70 = vector.load %arg5[%c0_36, %c0_37] : memref<1x128xf32, #tpu.memory_space<vmem>>, vector<1x128xf32>
    %71 = vector.broadcast %70 : vector<1x128xf32> to vector<32x128xf32>
    %72 = arith.addf %69, %71 : vector<32x128xf32>
    %cst_38 = arith.constant 0.000000e+00 : f32
    %73 = vector.broadcast %cst_38 : f32 to vector<32x128xf32>
    %74 = arith.maximumf %72, %73 : vector<32x128xf32>
    %75 = arith.truncf %74 : vector<32x128xf32> to vector<32x128xbf16>
    %c0_39 = arith.constant 0 : index
    %c0_40 = arith.constant 0 : index
    %76 = vector.load %arg6[%c0_39, %c0_40] : memref<32x128xbf16, #tpu.memory_space<vmem>>, vector<32x128xbf16>
    tpu.vector_store %arg6[%c0_39, %c0_40], %75 {strides = array<i32>} : memref<32x128xbf16, #tpu.memory_space<vmem>>, vector<32x128xbf16>,
    return
  }
  func.func @transform_0(%arg0: i32) -> (i32, i32) {
    %c0_i32 = arith.constant 0 : i32
    %c0_i32_0 = arith.constant 0 : i32
    return %arg0, %c0_i32 : i32, i32
  }
  func.func @transform_1(%arg0: i32) -> (i32, i32, i32) {
    %c0_i32 = arith.constant 0 : i32
    %c0_i32_0 = arith.constant 0 : i32
    %c0_i32_1 = arith.constant 0 : i32
    %c0_i32_2 = arith.constant 0 : i32
    return %c0_i32, %c0_i32_0, %c0_i32_1 : i32, i32, i32
  }
  func.func @transform_2(%arg0: i32) -> (i32, i32) {
    %c0_i32 = arith.constant 0 : i32
    %c0_i32_0 = arith.constant 0 : i32
    %c0_i32_1 = arith.constant 0 : i32
    return %c0_i32, %c0_i32_0 : i32, i32
  }
  func.func @transform_3(%arg0: i32) -> (i32, i32, i32) {
    %c0_i32 = arith.constant 0 : i32
    %c0_i32_0 = arith.constant 0 : i32
    %c0_i32_1 = arith.constant 0 : i32
    %c0_i32_2 = arith.constant 0 : i32
    return %c0_i32, %c0_i32_0, %c0_i32_1 : i32, i32, i32
  }
  func.func @transform_4(%arg0: i32) -> (i32, i32) {
    %c0_i32 = arith.constant 0 : i32
    %c0_i32_0 = arith.constant 0 : i32
    %c0_i32_1 = arith.constant 0 : i32
    return %c0_i32, %c0_i32_0 : i32, i32
  }
  func.func @transform_5(%arg0: i32) -> (i32, i32) {
    %c0_i32 = arith.constant 0 : i32
    %c0_i32_0 = arith.constant 0 : i32
    return %arg0, %c0_i32 : i32, i32
  }
}

</mosaic_0001>

<llo_original>
// kernel: double_conv.1
$region0: #{double_conv.1}
  #allocation0 [shape = 'u32[]', space=smem, size = 0x4, offset = 0x4, fixed_abs, tag = 'smem constant byte address 0x4 - core index']
  #allocation1 [shape = 'u32[144,128]{1,0:T(1,128)}', space=vmem, size = 0x12000, scoped, tag = 'internal scratch']
  %s0 = inlined_call_operand.vmem [shape: bf16[32,128], index: 0, kind: input, shape index: {}]
  %s1 = inlined_call_operand.vmem [shape: bf16[3,128,128], index: 1, kind: input, shape index: {}]
  %s2 = inlined_call_operand.vmem [shape: f32[1,128], index: 2, kind: input, shape index: {}]
  %s3 = inlined_call_operand.vmem [shape: bf16[3,128,128], index: 3, kind: input, shape index: {}]
  %s4 = inlined_call_operand.vmem [shape: f32[1,128], index: 4, kind: input, shape index: {}]
  %s5 = inlined_call_operand.vmem [shape: bf16[32,128], index: 5, kind: output, shape index: {}]
  %s6 = sld [smem:[#allocation0]]
  $region30: #{double_conv.1} parent=0
    _
  %s8 = ssub.s32 1, %s6
  %s9 = scalar_select 0, %s8, %s6
  // Predicated region
  $region2: #{double_conv.1} parent=0 // pred_check
    _
  $region3: #{double_conv.1} parent=0 // pred_check_branch
    %11 = sbr.rel (0) target = $region5
  $region4: #{double_conv.1} parent=0 // pred_region
    _
  $region5: #{double_conv.1} parent=0 // pred_fallthru
    _
  // Predicated region
  $region6: #{double_conv.1} parent=0 // pred_check
    _
  $region7: #{double_conv.1} parent=0 // pred_check_branch
    %13 = sbr.rel (0) target = $region9
  $region8: #{double_conv.1} parent=0 // pred_region
    _
  $region9: #{double_conv.1} parent=0 // pred_fallthru
    _
  // Predicated region
  $region10: #{double_conv.1} parent=0 // pred_check
    _
  $region11: #{double_conv.1} parent=0 // pred_check_branch
    %15 = sbr.rel (0) target = $region13
  $region12: #{double_conv.1} parent=0 // pred_region
    _
  $region13: #{double_conv.1} parent=0 // pred_fallthru
    _
  // Predicated region
  $region14: #{double_conv.1} parent=0 // pred_check
    _
  $region15: #{double_conv.1} parent=0 // pred_check_branch
    %17 = sbr.rel (0) target = $region17
  $region16: #{double_conv.1} parent=0 // pred_region
    _
  $region17: #{double_conv.1} parent=0 // pred_fallthru
    _
  // Predicated region
  $region18: #{double_conv.1} parent=0 // pred_check
    _
  $region19: #{double_conv.1} parent=0 // pred_check_branch
    %19 = sbr.rel (0) target = $region21
  $region20: #{double_conv.1} parent=0 // pred_region
    _
  $region21: #{double_conv.1} parent=0 // pred_fallthru
    _
  %v21 = vlaneseq
  %v22 = vshrl.u32 %v21, 7
  %v23 = vadd.s32 %v22, 8
  %v24 = vadd.s32 %v22, 16
  %v25 = vadd.s32 %v22, 24
  %vm26 = vcmp.lt.s32.totalorder %v22, 0
  %v27 = vsub.s32 0, %v22
  %v28 = vsel %vm26, %v27, %v22
  %v29 = vshrl.u32 %v28, 4
  %v30 = vand.u32 %v28, 15
  %v31 = vsub.s32 0, %v30
  %v32 = vsel %vm26, %v31, %v30
  %vm33 = vcmp.lt.s32.totalorder %v23, 0
  %v34 = vsub.s32 0, %v23
  %v35 = vsel %vm33, %v34, %v23
  %v36 = vshrl.u32 %v35, 4
  %v37 = vand.u32 %v35, 15
  %v38 = vsub.s32 0, %v37
  %v39 = vsel %vm33, %v38, %v37
  %vm40 = vcmp.lt.s32.totalorder %v24, 0
  %v41 = vsub.s32 0, %v24
  %v42 = vsel %vm40, %v41, %v24
  %v43 = vshrl.u32 %v42, 4
  %v44 = vand.u32 %v42, 15
  %v45 = vsub.s32 0, %v44
  %v46 = vsel %vm40, %v45, %v44
  %vm47 = vcmp.lt.s32.totalorder %v25, 0
  %v48 = vsub.s32 0, %v25
  %v49 = vsel %vm47, %v48, %v25
  %v50 = vshrl.u32 %v49, 4
  %v51 = vand.u32 %v49, 15
  %v52 = vsub.s32 0, %v51
  %v53 = vsel %vm47, %v52, %v51
  %vm54 = vcmp.ne.s32.totalorder %v32, 0
  %vm55 = vcmp.ne.s32.totalorder %v39, 0
  %vm56 = vcmp.ne.s32.totalorder %v46, 0
  %vm57 = vcmp.ne.s32.totalorder %v53, 0
  %vm58 = vcmp.lt.s32.totalorder %v32, 0
  %vm59 = vcmp.lt.s32.totalorder %v39, 0
  %vm60 = vcmp.lt.s32.totalorder %v46, 0
  %vm61 = vcmp.lt.s32.totalorder %v53, 0
  %vm62 = vmand %vm58, %vm54
  %vm63 = vmand %vm59, %vm55
  %vm64 = vmand %vm60, %vm56
  %vm65 = vmand %vm61, %vm57
  %v66 = vadd.s32 %v32, 16
  %v67 = vadd.s32 %v39, 16
  %v68 = vadd.s32 %v46, 16
  %v69 = vadd.s32 %v53, 16
  %v70 = vsel %vm62, %v66, %v32
  %v71 = vsel %vm63, %v67, %v39
  %v72 = vsel %vm64, %v68, %v46
  %v73 = vsel %vm65, %v69, %v53
  %vm74 = vcmp.eq.s32.totalorder %v70, 0
  %vm75 = vcmp.eq.s32.totalorder %v71, 0
  %vm76 = vcmp.eq.s32.totalorder %v72, 0
  %vm77 = vcmp.eq.s32.totalorder %v73, 0
  %vm78 = vcmp.eq.s32.totalorder %v70, 15
  %vm79 = vcmp.eq.s32.totalorder %v71, 15
  %vm80 = vcmp.eq.s32.totalorder %v72, 15
  %vm81 = vcmp.eq.s32.totalorder %v73, 15
  %v82 = vld [vmem:[%s0] sm:$0xf]
  %v83 = vld [vmem:[%s0 + $0x4] sm:$0xf]
  %v84 = vld [vmem:[%s0 + $0x8] sm:$0xf]
  %v85 = vld [vmem:[%s0 + $0xc] sm:$0xf]
  %v86 = vld [vmem:[%s1] sm:$0xf]
  %v87 = vld [vmem:[%s1 + $0x4] sm:$0xf]
  %v88 = vld [vmem:[%s1 + $0x8] sm:$0xf]
  %v89 = vld [vmem:[%s1 + $0xc] sm:$0xf]
  %v90 = vld [vmem:[%s1 + $0x10] sm:$0xf]
  %v91 = vld [vmem:[%s1 + $0x14] sm:$0xf]
  %v92 = vld [vmem:[%s1 + $0x18] sm:$0xf]
  %v93 = vld [vmem:[%s1 + $0x1c] sm:$0xf]
  %v94 = vld [vmem:[%s1 + $0x20] sm:$0xf]
  %v95 = vld [vmem:[%s1 + $0x24] sm:$0xf]
  %v96 = vld [vmem:[%s1 + $0x28] sm:$0xf]
  %v97 = vld [vmem:[%s1 + $0x2c] sm:$0xf]
  %v98 = vld [vmem:[%s1 + $0x30] sm:$0xf]
  %v99 = vld [vmem:[%s1 + $0x34] sm:$0xf]
  %v100 = vld [vmem:[%s1 + $0x38] sm:$0xf]
  %v101 = vld [vmem:[%s1 + $0x3c] sm:$0xf]
  %v106 = vunpack.c.l.b16 %v82
  %v107 = vunpack.c.l.b16 %v83
  %v108 = vunpack.c.l.b16 %v84
  %v109 = vunpack.c.l.b16 %v85
  %v110 = vpack.c.b16 %v107, %v106
  %v111 = vpack.c.b16 %v109, %v108
  %v130 = vunpack.c.l.b16 %v86
  %v131 = vunpack.c.l.b16 %v87
  %v132 = vunpack.c.l.b16 %v88
  %v133 = vunpack.c.l.b16 %v89
  %v134 = vunpack.c.l.b16 %v90
  %v135 = vunpack.c.l.b16 %v91
  %v136 = vunpack.c.l.b16 %v92
  %v137 = vunpack.c.l.b16 %v93
  %v138 = vunpack.c.l.b16 %v94
  %v139 = vunpack.c.l.b16 %v95
  %v140 = vunpack.c.l.b16 %v96
  %v141 = vunpack.c.l.b16 %v97
  %v142 = vunpack.c.l.b16 %v98
  %v143 = vunpack.c.l.b16 %v99
  %v144 = vunpack.c.l.b16 %v100
  %v145 = vunpack.c.l.b16 %v101
  %v146 = vpack.c.b16 %v131, %v130
  %v147 = vpack.c.b16 %v133, %v132
  %v148 = vpack.c.b16 %v135, %v134
  %v149 = vpack.c.b16 %v137, %v136
  %v150 = vpack.c.b16 %v139, %v138
  %v151 = vpack.c.b16 %v141, %v140
  %v152 = vpack.c.b16 %v143, %v142
  %v153 = vpack.c.b16 %v145, %v144
  %162 = vmatprep.subr.bf16.mxu0 0
  %163 = vmatpush1.bf16.msra.mxu0 %v146
  %164 = vmatprep.subr.bf16.mxu0 0
  %165 = vmatpush1.bf16.msra.mxu0 %v147
  %166 = vmatprep.subr.bf16.mxu0 0
  %167 = vmatpush1.bf16.msra.mxu0 %v148
  %168 = vmatprep.subr.bf16.mxu0 0
  %169 = vmatpush1.bf16.msra.mxu0 %v149
  %170 = vmatprep.subr.bf16.mxu0 0
  %171 = vmatpush1.bf16.msra.mxu0 %v150
  %172 = vmatprep.subr.bf16.mxu0 0
  %173 = vmatpush1.bf16.msra.mxu0 %v151
  %174 = vmatprep.subr.bf16.mxu0 0
  %175 = vmatpush1.bf16.msra.mxu0 %v152
  %176 = vmatprep.subr.bf16.mxu0 0
  %177 = vmatpush1.bf16.msra.mxu0 %v153
  %178 = vmatprep.subr.bf16.mxu0 0
  %179 = vmatpush1.bf16.msra.mxu0 0
  %180 = vmatprep.subr.bf16.mxu0 0
  %181 = vmatpush1.bf16.msra.mxu0 0
  %182 = vmatprep.subr.bf16.mxu0 0
  %183 = vmatpush1.bf16.msra.mxu0 0
  %184 = vmatprep.subr.bf16.mxu0 0
  %185 = vmatpush1.bf16.msra.mxu0 0
  %186 = vmatprep.subr.bf16.mxu0 0
  %187 = vmatpush1.bf16.msra.mxu0 0
  %188 = vmatprep.subr.bf16.mxu0 0
  %189 = vmatpush1.bf16.msra.mxu0 0
  %190 = vmatprep.subr.bf16.mxu0 0
  %191 = vmatpush1.bf16.msra.mxu0 0
  %192 = vmatprep.subr.bf16.mxu0 0
  %193 = vmatpush1.bf16.msra.mxu0 0
  %194 = vmatprep.mubr.bf16.mxu0 0
  %195 = vmatmul.mubr.bf16.gmra.mrb[0].mxu0 %v110
  %v196 = vpop.f32.mrb[0].mxu0
  %v197 = vadd.f32 0.0, %v196
  %v198 = vpop.f32.mrb[0].mxu0
  %v199 = vpop.f32.mrb[0].mxu0
  %v200 = vadd.f32 0.0, %v199
  %v201 = vpop.f32.mrb[0].mxu0
  %202 = vmatprep.mubr.bf16.mxu0 0
  %203 = vmatmul.mubr.bf16.gmra.mrb[0].mxu0 %v111
  %v204 = vpop.f32.mrb[0].mxu0
  %v205 = vadd.f32 0.0, %v204
  %v206 = vpop.f32.mrb[0].mxu0
  %v207 = vpop.f32.mrb[0].mxu0
  %v208 = vadd.f32 0.0, %v207
  %v209 = vpop.f32.mrb[0].mxu0
  %210 = vdwg.mxu0
  %s211 = scalar_lea.vmem %s1, 64
  %v212 = vld [vmem:[%s211] sm:$0xf]
  %v213 = vld [vmem:[%s211 + $0x4] sm:$0xf]
  %v214 = vld [vmem:[%s211 + $0x8] sm:$0xf]
  %v215 = vld [vmem:[%s211 + $0xc] sm:$0xf]
  %v216 = vld [vmem:[%s211 + $0x10] sm:$0xf]
  %v217 = vld [vmem:[%s211 + $0x14] sm:$0xf]
  %v218 = vld [vmem:[%s211 + $0x18] sm:$0xf]
  %v219 = vld [vmem:[%s211 + $0x1c] sm:$0xf]
  %v220 = vld [vmem:[%s211 + $0x20] sm:$0xf]
  %v221 = vld [vmem:[%s211 + $0x24] sm:$0xf]
  %v222 = vld [vmem:[%s211 + $0x28] sm:$0xf]
  %v223 = vld [vmem:[%s211 + $0x2c] sm:$0xf]
  %v224 = vld [vmem:[%s211 + $0x30] sm:$0xf]
  %v225 = vld [vmem:[%s211 + $0x34] sm:$0xf]
  %v226 = vld [vmem:[%s211 + $0x38] sm:$0xf]
  %v227 = vld [vmem:[%s211 + $0x3c] sm:$0xf]
  %v244 = vunpack.c.l.b16 %v212
  %v245 = vunpack.c.l.b16 %v213
  %v246 = vunpack.c.l.b16 %v214
  %v247 = vunpack.c.l.b16 %v215
  %v248 = vunpack.c.l.b16 %v216
  %v249 = vunpack.c.l.b16 %v217
  %v250 = vunpack.c.l.b16 %v218
  %v251 = vunpack.c.l.b16 %v219
  %v252 = vunpack.c.l.b16 %v220
  %v253 = vunpack.c.l.b16 %v221
  %v254 = vunpack.c.l.b16 %v222
  %v255 = vunpack.c.l.b16 %v223
  %v256 = vunpack.c.l.b16 %v224
  %v257 = vunpack.c.l.b16 %v225
  %v258 = vunpack.c.l.b16 %v226
  %v259 = vunpack.c.l.b16 %v227
  %v260 = vpack.c.b16 %v245, %v244
  %v261 = vpack.c.b16 %v247, %v246
  %v262 = vpack.c.b16 %v249, %v248
  %v263 = vpack.c.b16 %v251, %v250
  %v264 = vpack.c.b16 %v253, %v252
  %v265 = vpack.c.b16 %v255, %v254
  %v266 = vpack.c.b16 %v257, %v256
  %v267 = vpack.c.b16 %v259, %v258
  %276 = vmatprep.subr.bf16.mxu0 0
  %277 = vmatpush1.bf16.msra.mxu0 %v260
  %278 = vmatprep.subr.bf16.mxu0 0
  %279 = vmatpush1.bf16.msra.mxu0 %v261
  %280 = vmatprep.subr.bf16.mxu0 0
  %281 = vmatpush1.bf16.msra.mxu0 %v262
  %282 = vmatprep.subr.bf16.mxu0 0
  %283 = vmatpush1.bf16.msra.mxu0 %v263
  %284 = vmatprep.subr.bf16.mxu0 0
  %285 = vmatpush1.bf16.msra.mxu0 %v264
  %286 = vmatprep.subr.bf16.mxu0 0
  %287 = vmatpush1.bf16.msra.mxu0 %v265
  %288 = vmatprep.subr.bf16.mxu0 0
  %289 = vmatpush1.bf16.msra.mxu0 %v266
  %290 = vmatprep.subr.bf16.mxu0 0
  %291 = vmatpush1.bf16.msra.mxu0 %v267
  %292 = vmatprep.subr.bf16.mxu0 0
  %293 = vmatpush1.bf16.msra.mxu0 0
  %294 = vmatprep.subr.bf16.mxu0 0
  %295 = vmatpush1.bf16.msra.mxu0 0
  %296 = vmatprep.subr.bf16.mxu0 0
  %297 = vmatpush1.bf16.msra.mxu0 0
  %298 = vmatprep.subr.bf16.mxu0 0
  %299 = vmatpush1.bf16.msra.mxu0 0
  %300 = vmatprep.subr.bf16.mxu0 0
  %301 = vmatpush1.bf16.msra.mxu0 0
  %302 = vmatprep.subr.bf16.mxu0 0
  %303 = vmatpush1.bf16.msra.mxu0 0
  %304 = vmatprep.subr.bf16.mxu0 0
  %305 = vmatpush1.bf16.msra.mxu0 0
  %306 = vmatprep.subr.bf16.mxu0 0
  %307 = vmatpush1.bf16.msra.mxu0 0
  %308 = vmatprep.mubr.bf16.mxu0 0
  %309 = vmatmul.mubr.bf16.gmra.mrb[0].mxu0 %v110
  %v310 = vpop.f32.mrb[0].mxu0
  %v311 = vadd.f32 0.0, %v310
  %v312 = vpop.f32.mrb[0].mxu0
  %v313 = vpop.f32.mrb[0].mxu0
  %v314 = vadd.f32 0.0, %v313
  %v315 = vpop.f32.mrb[0].mxu0
  %316 = vmatprep.mubr.bf16.mxu0 0
  %317 = vmatmul.mubr.bf16.gmra.mrb[0].mxu0 %v111
  %v318 = vpop.f32.mrb[0].mxu0
  %v319 = vadd.f32 0.0, %v318
  %v320 = vpop.f32.mrb[0].mxu0
  %v321 = vpop.f32.mrb[0].mxu0
  %v322 = vadd.f32 0.0, %v321
  %v323 = vpop.f32.mrb[0].mxu0
  %324 = vdwg.mxu0
  %s325 = scalar_lea.vmem %s1, 128
  %v326 = vld [vmem:[%s325] sm:$0xf]
  %v327 = vld [vmem:[%s325 + $0x4] sm:$0xf]
  %v328 = vld [vmem:[%s325 + $0x8] sm:$0xf]
  %v329 = vld [vmem:[%s325 + $0xc] sm:$0xf]
  %v330 = vld [vmem:[%s325 + $0x10] sm:$0xf]
  %v331 = vld [vmem:[%s325 + $0x14] sm:$0xf]
  %v332 = vld [vmem:[%s325 + $0x18] sm:$0xf]
  %v333 = vld [vmem:[%s325 + $0x1c] sm:$0xf]
  %v334 = vld [vmem:[%s325 + $0x20] sm:$0xf]
  %v335 = vld [vmem:[%s325 + $0x24] sm:$0xf]
  %v336 = vld [vmem:[%s325 + $0x28] sm:$0xf]
  %v337 = vld [vmem:[%s325 + $0x2c] sm:$0xf]
  %v338 = vld [vmem:[%s325 + $0x30] sm:$0xf]
  %v339 = vld [vmem:[%s325 + $0x34] sm:$0xf]
  %v340 = vld [vmem:[%s325 + $0x38] sm:$0xf]
  %v341 = vld [vmem:[%s325 + $0x3c] sm:$0xf]
  %v358 = vunpack.c.l.b16 %v326
  %v359 = vunpack.c.l.b16 %v327
  %v360 = vunpack.c.l.b16 %v328
  %v361 = vunpack.c.l.b16 %v329
  %v362 = vunpack.c.l.b16 %v330
  %v363 = vunpack.c.l.b16 %v331
  %v364 = vunpack.c.l.b16 %v332
  %v365 = vunpack.c.l.b16 %v333
  %v366 = vunpack.c.l.b16 %v334
  %v367 = vunpack.c.l.b16 %v335
  %v368 = vunpack.c.l.b16 %v336
  %v369 = vunpack.c.l.b16 %v337
  %v370 = vunpack.c.l.b16 %v338
  %v371 = vunpack.c.l.b16 %v339
  %v372 = vunpack.c.l.b16 %v340
  %v373 = vunpack.c.l.b16 %v341
  %v374 = vpack.c.b16 %v359, %v358
  %v375 = vpack.c.b16 %v361, %v360
  %v376 = vpack.c.b16 %v363, %v362
  %v377 = vpack.c.b16 %v365, %v364
  %v378 = vpack.c.b16 %v367, %v366
  %v379 = vpack.c.b16 %v369, %v368
  %v380 = vpack.c.b16 %v371, %v370
  %v381 = vpack.c.b16 %v373, %v372
  %390 = vmatprep.subr.bf16.mxu0 0
  %391 = vmatpush1.bf16.msra.mxu0 %v374
  %392 = vmatprep.subr.bf16.mxu0 0
  %393 = vmatpush1.bf16.msra.mxu0 %v375
  %394 = vmatprep.subr.bf16.mxu0 0
  %395 = vmatpush1.bf16.msra.mxu0 %v376
  %396 = vmatprep.subr.bf16.mxu0 0
  %397 = vmatpush1.bf16.msra.mxu0 %v377
  %398 = vmatprep.subr.bf16.mxu0 0
  %399 = vmatpush1.bf16.msra.mxu0 %v378
  %400 = vmatprep.subr.bf16.mxu0 0
  %401 = vmatpush1.bf16.msra.mxu0 %v379
  %402 = vmatprep.subr.bf16.mxu0 0
  %403 = vmatpush1.bf16.msra.mxu0 %v380
  %404 = vmatprep.subr.bf16.mxu0 0
  %405 = vmatpush1.bf16.msra.mxu0 %v381
  %406 = vmatprep.subr.bf16.mxu0 0
  %407 = vmatpush1.bf16.msra.mxu0 0
  %408 = vmatprep.subr.bf16.mxu0 0
  %409 = vmatpush1.bf16.msra.mxu0 0
  %410 = vmatprep.subr.bf16.mxu0 0
  %411 = vmatpush1.bf16.msra.mxu0 0
  %412 = vmatprep.subr.bf16.mxu0 0
  %413 = vmatpush1.bf16.msra.mxu0 0
  %414 = vmatprep.subr.bf16.mxu0 0
  %415 = vmatpush1.bf16.msra.mxu0 0
  %416 = vmatprep.subr.bf16.mxu0 0
  %417 = vmatpush1.bf16.msra.mxu0 0
  %418 = vmatprep.subr.bf16.mxu0 0
  %419 = vmatpush1.bf16.msra.mxu0 0
  %420 = vmatprep.subr.bf16.mxu0 0
  %421 = vmatpush1.bf16.msra.mxu0 0
  %422 = vmatprep.mubr.bf16.mxu0 0
  %423 = vmatmul.mubr.bf16.gmra.mrb[0].mxu0 %v110
  %v424 = vpop.f32.mrb[0].mxu0
  %v425 = vadd.f32 0.0, %v424
  %v426 = vpop.f32.mrb[0].mxu0
  %v427 = vpop.f32.mrb[0].mxu0
  %v428 = vadd.f32 0.0, %v427
  %v429 = vpop.f32.mrb[0].mxu0
  %430 = vmatprep.mubr.bf16.mxu0 0
  %431 = vmatmul.mubr.bf16.gmra.mrb[0].mxu0 %v111
  %v432 = vpop.f32.mrb[0].mxu0
  %v433 = vadd.f32 0.0, %v432
  %v434 = vpop.f32.mrb[0].mxu0
  %v435 = vpop.f32.mrb[0].mxu0
  %v436 = vadd.f32 0.0, %v435
  %v437 = vpop.f32.mrb[0].mxu0
  %438 = vdwg.mxu0
  %v439 = vrot.slane %v197, 7
  %v440 = vrot.slane %v200, 7
  %v441 = vrot.slane %v205, 7
  %v442 = vrot.slane %v208, 7
  %vm443 = vcmp.lt.s32.totalorder %v22, 1
  %v444 = vsel %vm443, %v441, %v442
  %v445 = vsel %vm443, %v440, %v441
  %v446 = vsel %vm443, %v439, %v440
  %v447 = vsel %vm443, %v442, %v439
  %v448 = vsel %vm74, 1, 0
  %v449 = vsel %vm75, 1, 0
  %v450 = vsel %vm76, 1, 0
  %v451 = vsel %vm77, 1, 0
  %vm452 = vcmp.eq.s32.totalorder %v448, 1
  %vm453 = vcmp.eq.s32.totalorder %v449, 1
  %vm454 = vcmp.eq.s32.totalorder %v450, 1
  %vm455 = vcmp.eq.s32.totalorder %v451, 1
  %v456 = vsel %vm452, 0.0, %v447
  %v457 = vsel %vm453, 0.0, %v446
  %v458 = vsel %vm454, 0.0, %v445
  %v459 = vsel %vm455, 0.0, %v444
  %v460 = vrot.slane %v425, 1
  %v461 = vrot.slane %v428, 1
  %v462 = vrot.slane %v433, 1
  %v463 = vrot.slane %v436, 1
  %vm464 = vcmp.lt.s32.totalorder %v22, 7
  %v465 = vsel %vm464, %v462, %v463
  %v466 = vsel %vm464, %v461, %v462
  %v467 = vsel %vm464, %v460, %v461
  %v468 = vsel %vm464, %v463, %v460
  %v469 = vsel %vm78, 1, 0
  %v470 = vsel %vm79, 1, 0
  %v471 = vsel %vm80, 1, 0
  %v472 = vsel %vm81, 1, 0
  %vm473 = vcmp.eq.s32.totalorder %v469, 1
  %vm474 = vcmp.eq.s32.totalorder %v470, 1
  %vm475 = vcmp.eq.s32.totalorder %v471, 1
  %vm476 = vcmp.eq.s32.totalorder %v472, 1
  %v477 = vsel %vm473, 0.0, %v467
  %v478 = vsel %vm474, 0.0, %v466
  %v479 = vsel %vm475, 0.0, %v465
  %v480 = vsel %vm476, 0.0, %v468
  %v481 = vadd.f32 %v456, %v311
  %v482 = vadd.f32 %v457, %v314
  %v483 = vadd.f32 %v458, %v319
  %v484 = vadd.f32 %v459, %v322
  %v485 = vadd.f32 %v481, %v477
  %v486 = vadd.f32 %v482, %v478
  %v487 = vadd.f32 %v483, %v479
  %v488 = vadd.f32 %v484, %v480
  %v489 = vld [vmem:[%s2] sm:$0x1]
  %v491 = vlaneseq
  %v492 = vshrl.u32 %v491, 7
  %v493 = vsub.s32 0, %v492
  %v494 = vrot.slane %v489, %v493
  %v496 = vadd.f32 %v485, %v494
  %v497 = vadd.f32 %v486, %v494
  %v498 = vadd.f32 %v487, %v494
  %v499 = vadd.f32 %v488, %v494
  %v500 = vmax.f32 %v496, 0.0
  %v501 = vmax.f32 %v497, 0.0
  %v502 = vmax.f32 %v498, 0.0
  %v503 = vmax.f32 %v499, 0.0
  %v504 = vpack.c.bf16 %v501, %v500
  %v505 = vpack.c.bf16 %v503, %v502
  %v506 = vld [vmem:[%s3] sm:$0xf]
  %v507 = vld [vmem:[%s3 + $0x4] sm:$0xf]
  %v508 = vld [vmem:[%s3 + $0x8] sm:$0xf]
  %v509 = vld [vmem:[%s3 + $0xc] sm:$0xf]
  %v510 = vld [vmem:[%s3 + $0x10] sm:$0xf]
  %v511 = vld [vmem:[%s3 + $0x14] sm:$0xf]
  %v512 = vld [vmem:[%s3 + $0x18] sm:$0xf]
  %v513 = vld [vmem:[%s3 + $0x1c] sm:$0xf]
  %v514 = vld [vmem:[%s3 + $0x20] sm:$0xf]
  %v515 = vld [vmem:[%s3 + $0x24] sm:$0xf]
  %v516 = vld [vmem:[%s3 + $0x28] sm:$0xf]
  %v517 = vld [vmem:[%s3 + $0x2c] sm:$0xf]
  %v518 = vld [vmem:[%s3 + $0x30] sm:$0xf]
  %v519 = vld [vmem:[%s3 + $0x34] sm:$0xf]
  %v520 = vld [vmem:[%s3 + $0x38] sm:$0xf]
  %v521 = vld [vmem:[%s3 + $0x3c] sm:$0xf]
  %v538 = vunpack.c.l.b16 %v506
  %v539 = vunpack.c.l.b16 %v507
  %v540 = vunpack.c.l.b16 %v508
  %v541 = vunpack.c.l.b16 %v509
  %v542 = vunpack.c.l.b16 %v510
  %v543 = vunpack.c.l.b16 %v511
  %v544 = vunpack.c.l.b16 %v512
  %v545 = vunpack.c.l.b16 %v513
  %v546 = vunpack.c.l.b16 %v514
  %v547 = vunpack.c.l.b16 %v515
  %v548 = vunpack.c.l.b16 %v516
  %v549 = vunpack.c.l.b16 %v517
  %v550 = vunpack.c.l.b16 %v518
  %v551 = vunpack.c.l.b16 %v519
  %v552 = vunpack.c.l.b16 %v520
  %v553 = vunpack.c.l.b16 %v521
  %v554 = vpack.c.b16 %v539, %v538
  %v555 = vpack.c.b16 %v541, %v540
  %v556 = vpack.c.b16 %v543, %v542
  %v557 = vpack.c.b16 %v545, %v544
  %v558 = vpack.c.b16 %v547, %v546
  %v559 = vpack.c.b16 %v549, %v548
  %v560 = vpack.c.b16 %v551, %v550
  %v561 = vpack.c.b16 %v553, %v552
  %570 = vmatprep.subr.bf16.mxu0 0
  %571 = vmatpush1.bf16.msra.mxu0 %v554
  %572 = vmatprep.subr.bf16.mxu0 0
  %573 = vmatpush1.bf16.msra.mxu0 %v555
  %574 = vmatprep.subr.bf16.mxu0 0
  %575 = vmatpush1.bf16.msra.mxu0 %v556
  %576 = vmatprep.subr.bf16.mxu0 0
  %577 = vmatpush1.bf16.msra.mxu0 %v557
  %578 = vmatprep.subr.bf16.mxu0 0
  %579 = vmatpush1.bf16.msra.mxu0 %v558
  %580 = vmatprep.subr.bf16.mxu0 0
  %581 = vmatpush1.bf16.msra.mxu0 %v559
  %582 = vmatprep.subr.bf16.mxu0 0
  %583 = vmatpush1.bf16.msra.mxu0 %v560
  %584 = vmatprep.subr.bf16.mxu0 0
  %585 = vmatpush1.bf16.msra.mxu0 %v561
  %586 = vmatprep.subr.bf16.mxu0 0
  %587 = vmatpush1.bf16.msra.mxu0 0
  %588 = vmatprep.subr.bf16.mxu0 0
  %589 = vmatpush1.bf16.msra.mxu0 0
  %590 = vmatprep.subr.bf16.mxu0 0
  %591 = vmatpush1.bf16.msra.mxu0 0
  %592 = vmatprep.subr.bf16.mxu0 0
  %593 = vmatpush1.bf16.msra.mxu0 0
  %594 = vmatprep.subr.bf16.mxu0 0
  %595 = vmatpush1.bf16.msra.mxu0 0
  %596 = vmatprep.subr.bf16.mxu0 0
  %597 = vmatpush1.bf16.msra.mxu0 0
  %598 = vmatprep.subr.bf16.mxu0 0
  %599 = vmatpush1.bf16.msra.mxu0 0
  %600 = vmatprep.subr.bf16.mxu0 0
  %601 = vmatpush1.bf16.msra.mxu0 0
  %602 = vmatprep.mubr.bf16.mxu0 0
  %603 = vmatmul.mubr.bf16.gmra.mrb[0].mxu0 %v504
  %v604 = vpop.f32.mrb[0].mxu0
  %v605 = vadd.f32 0.0, %v604
  %v606 = vpop.f32.mrb[0].mxu0
  %v607 = vpop.f32.mrb[0].mxu0
  %v608 = vadd.f32 0.0, %v607
  %v609 = vpop.f32.mrb[0].mxu0
  %610 = vmatprep.mubr.bf16.mxu0 0
  %611 = vmatmul.mubr.bf16.gmra.mrb[0].mxu0 %v505
  %v612 = vpop.f32.mrb[0].mxu0
  %v613 = vadd.f32 0.0, %v612
  %v614 = vpop.f32.mrb[0].mxu0
  %v615 = vpop.f32.mrb[0].mxu0
  %v616 = vadd.f32 0.0, %v615
  %v617 = vpop.f32.mrb[0].mxu0
  %618 = vdwg.mxu0
  %s619 = scalar_lea.vmem %s3, 64
  %v620 = vld [vmem:[%s619] sm:$0xf]
  %v621 = vld [vmem:[%s619 + $0x4] sm:$0xf]
  %v622 = vld [vmem:[%s619 + $0x8] sm:$0xf]
  %v623 = vld [vmem:[%s619 + $0xc] sm:$0xf]
  %v624 = vld [vmem:[%s619 + $0x10] sm:$0xf]
  %v625 = vld [vmem:[%s619 + $0x14] sm:$0xf]
  %v626 = vld [vmem:[%s619 + $0x18] sm:$0xf]
  %v627 = vld [vmem:[%s619 + $0x1c] sm:$0xf]
  %v628 = vld [vmem:[%s619 + $0x20] sm:$0xf]
  %v629 = vld [vmem:[%s619 + $0x24] sm:$0xf]
  %v630 = vld [vmem:[%s619 + $0x28] sm:$0xf]
  %v631 = vld [vmem:[%s619 + $0x2c] sm:$0xf]
  %v632 = vld [vmem:[%s619 + $0x30] sm:$0xf]
  %v633 = vld [vmem:[%s619 + $0x34] sm:$0xf]
  %v634 = vld [vmem:[%s619 + $0x38] sm:$0xf]
  %v635 = vld [vmem:[%s619 + $0x3c] sm:$0xf]
  %v652 = vunpack.c.l.b16 %v620
  %v653 = vunpack.c.l.b16 %v621
  %v654 = vunpack.c.l.b16 %v622
  %v655 = vunpack.c.l.b16 %v623
  %v656 = vunpack.c.l.b16 %v624
  %v657 = vunpack.c.l.b16 %v625
  %v658 = vunpack.c.l.b16 %v626
  %v659 = vunpack.c.l.b16 %v627
  %v660 = vunpack.c.l.b16 %v628
  %v661 = vunpack.c.l.b16 %v629
  %v662 = vunpack.c.l.b16 %v630
  %v663 = vunpack.c.l.b16 %v631
  %v664 = vunpack.c.l.b16 %v632
  %v665 = vunpack.c.l.b16 %v633
  %v666 = vunpack.c.l.b16 %v634
  %v667 = vunpack.c.l.b16 %v635
  %v668 = vpack.c.b16 %v653, %v652
  %v669 = vpack.c.b16 %v655, %v654
  %v670 = vpack.c.b16 %v657, %v656
  %v671 = vpack.c.b16 %v659, %v658
  %v672 = vpack.c.b16 %v661, %v660
  %v673 = vpack.c.b16 %v663, %v662
  %v674 = vpack.c.b16 %v665, %v664
  %v675 = vpack.c.b16 %v667, %v666
  %684 = vmatprep.subr.bf16.mxu0 0
  %685 = vmatpush1.bf16.msra.mxu0 %v668
  %686 = vmatprep.subr.bf16.mxu0 0
  %687 = vmatpush1.bf16.msra.mxu0 %v669
  %688 = vmatprep.subr.bf16.mxu0 0
  %689 = vmatpush1.bf16.msra.mxu0 %v670
  %690 = vmatprep.subr.bf16.mxu0 0
  %691 = vmatpush1.bf16.msra.mxu0 %v671
  %692 = vmatprep.subr.bf16.mxu0 0
  %693 = vmatpush1.bf16.msra.mxu0 %v672
  %694 = vmatprep.subr.bf16.mxu0 0
  %695 = vmatpush1.bf16.msra.mxu0 %v673
  %696 = vmatprep.subr.bf16.mxu0 0
  %697 = vmatpush1.bf16.msra.mxu0 %v674
  %698 = vmatprep.subr.bf16.mxu0 0
  %699 = vmatpush1.bf16.msra.mxu0 %v675
  %700 = vmatprep.subr.bf16.mxu0 0
  %701 = vmatpush1.bf16.msra.mxu0 0
  %702 = vmatprep.subr.bf16.mxu0 0
  %703 = vmatpush1.bf16.msra.mxu0 0
  %704 = vmatprep.subr.bf16.mxu0 0
  %705 = vmatpush1.bf16.msra.mxu0 0
  %706 = vmatprep.subr.bf16.mxu0 0
  %707 = vmatpush1.bf16.msra.mxu0 0
  %708 = vmatprep.subr.bf16.mxu0 0
  %709 = vmatpush1.bf16.msra.mxu0 0
  %710 = vmatprep.subr.bf16.mxu0 0
  %711 = vmatpush1.bf16.msra.mxu0 0
  %712 = vmatprep.subr.bf16.mxu0 0
  %713 = vmatpush1.bf16.msra.mxu0 0
  %714 = vmatprep.subr.bf16.mxu0 0
  %715 = vmatpush1.bf16.msra.mxu0 0
  %716 = vmatprep.mubr.bf16.mxu0 0
  %717 = vmatmul.mubr.bf16.gmra.mrb[0].mxu0 %v504
  %v718 = vpop.f32.mrb[0].mxu0
  %v719 = vadd.f32 0.0, %v718
  %v720 = vpop.f32.mrb[0].mxu0
  %v721 = vpop.f32.mrb[0].mxu0
  %v722 = vadd.f32 0.0, %v721
  %v723 = vpop.f32.mrb[0].mxu0
  %724 = vmatprep.mubr.bf16.mxu0 0
  %725 = vmatmul.mubr.bf16.gmra.mrb[0].mxu0 %v505
  %v726 = vpop.f32.mrb[0].mxu0
  %v727 = vadd.f32 0.0, %v726
  %v728 = vpop.f32.mrb[0].mxu0
  %v729 = vpop.f32.mrb[0].mxu0
  %v730 = vadd.f32 0.0, %v729
  %v731 = vpop.f32.mrb[0].mxu0
  %732 = vdwg.mxu0
  %s733 = scalar_lea.vmem %s3, 128
  %v734 = vld [vmem:[%s733] sm:$0xf]
  %v735 = vld [vmem:[%s733 + $0x4] sm:$0xf]
  %v736 = vld [vmem:[%s733 + $0x8] sm:$0xf]
  %v737 = vld [vmem:[%s733 + $0xc] sm:$0xf]
  %v738 = vld [vmem:[%s733 + $0x10] sm:$0xf]
  %v739 = vld [vmem:[%s733 + $0x14] sm:$0xf]
  %v740 = vld [vmem:[%s733 + $0x18] sm:$0xf]
  %v741 = vld [vmem:[%s733 + $0x1c] sm:$0xf]
  %v742 = vld [vmem:[%s733 + $0x20] sm:$0xf]
  %v743 = vld [vmem:[%s733 + $0x24] sm:$0xf]
  %v744 = vld [vmem:[%s733 + $0x28] sm:$0xf]
  %v745 = vld [vmem:[%s733 + $0x2c] sm:$0xf]
  %v746 = vld [vmem:[%s733 + $0x30] sm:$0xf]
  %v747 = vld [vmem:[%s733 + $0x34] sm:$0xf]
  %v748 = vld [vmem:[%s733 + $0x38] sm:$0xf]
  %v749 = vld [vmem:[%s733 + $0x3c] sm:$0xf]
  %v766 = vunpack.c.l.b16 %v734
  %v767 = vunpack.c.l.b16 %v735
  %v768 = vunpack.c.l.b16 %v736
  %v769 = vunpack.c.l.b16 %v737
  %v770 = vunpack.c.l.b16 %v738
  %v771 = vunpack.c.l.b16 %v739
  %v772 = vunpack.c.l.b16 %v740
  %v773 = vunpack.c.l.b16 %v741
  %v774 = vunpack.c.l.b16 %v742
  %v775 = vunpack.c.l.b16 %v743
  %v776 = vunpack.c.l.b16 %v744
  %v777 = vunpack.c.l.b16 %v745
  %v778 = vunpack.c.l.b16 %v746
  %v779 = vunpack.c.l.b16 %v747
  %v780 = vunpack.c.l.b16 %v748
  %v781 = vunpack.c.l.b16 %v749
  %v782 = vpack.c.b16 %v767, %v766
  %v783 = vpack.c.b16 %v769, %v768
  %v784 = vpack.c.b16 %v771, %v770
  %v785 = vpack.c.b16 %v773, %v772
  %v786 = vpack.c.b16 %v775, %v774
  %v787 = vpack.c.b16 %v777, %v776
  %v788 = vpack.c.b16 %v779, %v778
  %v789 = vpack.c.b16 %v781, %v780
  %798 = vmatprep.subr.bf16.mxu0 0
  %799 = vmatpush1.bf16.msra.mxu0 %v782
  %800 = vmatprep.subr.bf16.mxu0 0
  %801 = vmatpush1.bf16.msra.mxu0 %v783
  %802 = vmatprep.subr.bf16.mxu0 0
  %803 = vmatpush1.bf16.msra.mxu0 %v784
  %804 = vmatprep.subr.bf16.mxu0 0
  %805 = vmatpush1.bf16.msra.mxu0 %v785
  %806 = vmatprep.subr.bf16.mxu0 0
  %807 = vmatpush1.bf16.msra.mxu0 %v786
  %808 = vmatprep.subr.bf16.mxu0 0
  %809 = vmatpush1.bf16.msra.mxu0 %v787
  %810 = vmatprep.subr.bf16.mxu0 0
  %811 = vmatpush1.bf16.msra.mxu0 %v788
  %812 = vmatprep.subr.bf16.mxu0 0
  %813 = vmatpush1.bf16.msra.mxu0 %v789
  %814 = vmatprep.subr.bf16.mxu0 0
  %815 = vmatpush1.bf16.msra.mxu0 0
  %816 = vmatprep.subr.bf16.mxu0 0
  %817 = vmatpush1.bf16.msra.mxu0 0
  %818 = vmatprep.subr.bf16.mxu0 0
  %819 = vmatpush1.bf16.msra.mxu0 0
  %820 = vmatprep.subr.bf16.mxu0 0
  %821 = vmatpush1.bf16.msra.mxu0 0
  %822 = vmatprep.subr.bf16.mxu0 0
  %823 = vmatpush1.bf16.msra.mxu0 0
  %824 = vmatprep.subr.bf16.mxu0 0
  %825 = vmatpush1.bf16.msra.mxu0 0
  %826 = vmatprep.subr.bf16.mxu0 0
  %827 = vmatpush1.bf16.msra.mxu0 0
  %828 = vmatprep.subr.bf16.mxu0 0
  %829 = vmatpush1.bf16.msra.mxu0 0
  %830 = vmatprep.mubr.bf16.mxu0 0
  %831 = vmatmul.mubr.bf16.gmra.mrb[0].mxu0 %v504
  %v832 = vpop.f32.mrb[0].mxu0
  %v833 = vadd.f32 0.0, %v832
  %v834 = vpop.f32.mrb[0].mxu0
  %v835 = vpop.f32.mrb[0].mxu0
  %v836 = vadd.f32 0.0, %v835
  %v837 = vpop.f32.mrb[0].mxu0
  %838 = vmatprep.mubr.bf16.mxu0 0
  %839 = vmatmul.mubr.bf16.gmra.mrb[0].mxu0 %v505
  %v840 = vpop.f32.mrb[0].mxu0
  %v841 = vadd.f32 0.0, %v840
  %v842 = vpop.f32.mrb[0].mxu0
  %v843 = vpop.f32.mrb[0].mxu0
  %v844 = vadd.f32 0.0, %v843
  %v845 = vpop.f32.mrb[0].mxu0
  %846 = vdwg.mxu0
  %v847 = vrot.slane %v605, 7
  %v848 = vrot.slane %v608, 7
  %v849 = vrot.slane %v613, 7
  %v850 = vrot.slane %v616, 7
  %v851 = vsel %vm443, %v849, %v850
  %v852 = vsel %vm443, %v848, %v849
  %v853 = vsel %vm443, %v847, %v848
  %v854 = vsel %vm443, %v850, %v847
  %v855 = vsel %vm452, 0.0, %v854
  %v856 = vsel %vm453, 0.0, %v853
  %v857 = vsel %vm454, 0.0, %v852
  %v858 = vsel %vm455, 0.0, %v851
  %v859 = vrot.slane %v833, 1
  %v860 = vrot.slane %v836, 1
  %v861 = vrot.slane %v841, 1
  %v862 = vrot.slane %v844, 1
  %v863 = vsel %vm464, %v861, %v862
  %v864 = vsel %vm464, %v860, %v861
  %v865 = vsel %vm464, %v859, %v860
  %v866 = vsel %vm464, %v862, %v859
  %v867 = vsel %vm473, 0.0, %v865
  %v868 = vsel %vm474, 0.0, %v864
  %v869 = vsel %vm475, 0.0, %v863
  %v870 = vsel %vm476, 0.0, %v866
  %v871 = vadd.f32 %v855, %v719
  %v872 = vadd.f32 %v856, %v722
  %v873 = vadd.f32 %v857, %v727
  %v874 = vadd.f32 %v858, %v730
  %v875 = vadd.f32 %v871, %v867
  %v876 = vadd.f32 %v872, %v868
  %v877 = vadd.f32 %v873, %v869
  %v878 = vadd.f32 %v874, %v870
  %v879 = vld [vmem:[%s4] sm:$0x1]
  %v881 = vlaneseq
  %v882 = vshrl.u32 %v881, 7
  %v883 = vsub.s32 0, %v882
  %v884 = vrot.slane %v879, %v883
  %v886 = vadd.f32 %v875, %v884
  %v887 = vadd.f32 %v876, %v884
  %v888 = vadd.f32 %v877, %v884
  %v889 = vadd.f32 %v878, %v884
  %v890 = vmax.f32 %v886, 0.0
  %v891 = vmax.f32 %v887, 0.0
  %v892 = vmax.f32 %v888, 0.0
  %v893 = vmax.f32 %v889, 0.0
  %v894 = vpack.c.bf16 %v891, %v890
  %v895 = vpack.c.bf16 %v893, %v892
  %v898 = vunpack.c.l.b16 %v894
  %v899 = vunpack.c.h.b16 %v894
  %v900 = vunpack.c.l.b16 %v895
  %v901 = vunpack.c.h.b16 %v895
  %v902 = vpack.c.b16 %v898, %v898
  %v903 = vpack.c.b16 %v899, %v899
  %v904 = vpack.c.b16 %v900, %v900
  %v905 = vpack.c.b16 %v901, %v901
  %910 = vst [vmem:[%s5] sm:$0xf] %v902
  %911 = vst [vmem:[%s5 + $0x4] sm:$0xf] %v903
  %912 = vst [vmem:[%s5 + $0x8] sm:$0xf] %v904
  %913 = vst [vmem:[%s5 + $0xc] sm:$0xf] %v905
  // Predicated region
  $region22: #{double_conv.1} parent=0 // pred_check
    _
  $region23: #{double_conv.1} parent=0 // pred_check_branch
    %915 = sbr.rel (0) target = $region25
  $region24: #{double_conv.1} parent=0 // pred_region
    _
  $region25: #{double_conv.1} parent=0 // pred_fallthru
    _
  // Predicated region
  $region26: #{double_conv.1} parent=0 // pred_check
    _
  $region27: #{double_conv.1} parent=0 // pred_check_branch
    %917 = sbr.rel (0) target = $region29
  $region28: #{double_conv.1} parent=0 // pred_region
    _
  $region29: #{double_conv.1} parent=0 // pred_fallthru
    _

</llo_original>
